<compile_context>
chip_gen: v6e
topology: v6e:2x2x1
jax: 0.10.0
libtpu: 0.0.40
codegen_flags: <defaults>
</compile_context>

<pallas_src>
import math

import jax
import jax.numpy as jnp
from jax.experimental import pallas as pl
from jax.experimental.pallas import tpu as pltpu


def convblock_kernel(x_ref, w1_ref, b1_ref, w2_ref, b2_ref, out_ref):
    Bt, C, L = x_ref.shape
    L1 = L - 2                                      # after conv1 (k=3, valid)
    L2 = L - 4                                      # after conv2

    # Load each batch element's (C, L) slab once.
    xs = [x_ref[b] for b in range(Bt)]

    # ---- conv1: im2col with batch merged into the lane (N) dimension --------
    #   xcol[k*C + c, b*L1 + l] = x[b, c, l + k]
    xcol = jnp.concatenate(
        [jnp.concatenate([xb[:, k:k + L1] for xb in xs], axis=1)
         for k in range(3)],
        axis=0)                                     # (3C, Bt*L1)
    h = jnp.dot(w1_ref[...], xcol,
                preferred_element_type=jnp.float32)  # (C1, Bt*L1)
    h = jnp.maximum(h + b1_ref[...], 0.0)           # bias + ReLU (VPU filler)

    # ---- conv2: same formulation on the hidden activations ------------------
    #   hcol[k*C1 + c, b*L2 + l] = h[c, b*L1 + l + k]
    hcol = jnp.concatenate(
        [jnp.concatenate([h[:, b * L1 + k: b * L1 + k + L2] for b in range(Bt)],
                         axis=1)
         for k in range(3)],
        axis=0)                                     # (3C1, Bt*L2)
    y = jnp.dot(w2_ref[...], hcol,
                preferred_element_type=jnp.float32)  # (C2, Bt*L2)
    y = jnp.maximum(y + b2_ref[...], 0.0)

    # Per-batch lane-dense stores (L2 = 128 in the demo -> unmasked vst).
    for b in range(Bt):
        out_ref[b] = y[:, b * L2:(b + 1) * L2].astype(out_ref.dtype)


def _pick_block_b(B, C, L):
    """Batch elements per grid step."""
    in_bytes = C * L * 4
    # Target ~1 MiB of input per step for DMA efficiency; cap the in-kernel
    # unroll / per-step VMEM working set (~3.5x the input slab with im2col).
    bt = max(1, min((1 << 20) // in_bytes, 16))
    if B >= 2:
        # Keep at least two grid steps so v7x's two TensorCores both get work.
        bt = min(bt, max(1, B // 2))
    return min(bt, B)


def conv_block(x, w1, b1, w2, b2, *, block_b=None):
    """x: (B, C, L) f32.  w1: (C//2, C, 3), b1: (C//2,), w2: (C//4, C//2, 3),
    b2: (C//4,) in PyTorch Conv1d layout.  Returns (B, C//4, L-4)."""
    B, C, L = x.shape
    C1 = w1.shape[0]
    C2 = w2.shape[0]
    assert L >= 5, "need L >= 5 for two valid k=3 convolutions"
    L_out = L - 4

    Bt = _pick_block_b(B, C, L) if block_b is None else block_b
    n_steps = -(-B // Bt)
    B_pad = n_steps * Bt
    if B_pad != B:
        x = jnp.pad(x, ((0, B_pad - B), (0, 0), (0, 0)))

    # Unfold PyTorch (C_out, C_in, K) weights to (C_out, K*C_in) so that column
    # index k*C_in + c matches the in-kernel im2col row ordering.
    w1u = jnp.transpose(w1, (0, 2, 1)).reshape(C1, 3 * C)
    w2u = jnp.transpose(w2, (0, 2, 1)).reshape(C2, 3 * C1)
    b1c = b1.reshape(C1, 1)
    b2c = b2.reshape(C2, 1)

    out = pl.pallas_call(
        convblock_kernel,
        out_shape=jax.ShapeDtypeStruct((B_pad, C2, L_out), x.dtype),
        grid_spec=pltpu.PrefetchScalarGridSpec(
            num_scalar_prefetch=0,
            grid=(n_steps,),
            in_specs=[
                # Bt full (C, L) slabs per grid step (one large DMA).
                pl.BlockSpec((Bt, C, L), lambda j: (j, 0, 0)),
                # Small, constant weights / biases (VMEM resident).
                pl.BlockSpec((C1, 3 * C), lambda j: (0, 0)),
                pl.BlockSpec((C1, 1), lambda j: (0, 0)),
                pl.BlockSpec((C2, 3 * C1), lambda j: (0, 0)),
                pl.BlockSpec((C2, 1), lambda j: (0, 0)),
            ],
            out_specs=pl.BlockSpec((Bt, C2, L_out), lambda j: (j, 0, 0)),
        ),
        compiler_params=pltpu.CompilerParams(
            dimension_semantics=("parallel",)),
    )(x, w1u, b1c, w2u, b2c)

    if B_pad != B:
        out = out[:B]
    return out


# ---------------------------- pure-JAX reference ----------------------------
def _ref_conv1d(x, w, b):
    Bn, Cin, L = x.shape
    Cout, _, K = w.shape
    Lout = L - K + 1
    cols = jnp.stack([x[:, :, k:k + Lout] for k in range(K)], axis=2)  # (B,Cin,K,Lout)
    y = jnp.einsum("bckl,ock->bol", cols, w,
                   precision=jax.lax.Precision.HIGHEST)
    return y + b[None, :, None]


def _ref_conv_block(x, w1, b1, w2, b2):
    h = jnp.maximum(_ref_conv1d(x, w1, b1), 0.0)
    return jnp.maximum(_ref_conv1d(h, w2, b2), 0.0)


if __name__ == "__main__":
    # L chosen so the output length L - 4 = 128 (lane-dense stores); B = 8 so
    # the batch-blocked grid runs 2 parallel steps of Bt = 4 elements each.
    B, C, L = 8, 16, 132
    C1, C2, K = C // 2, C // 4, 3

    key = jax.random.PRNGKey(0)
    kx, kw1, kb1, kw2, kb2 = jax.random.split(key, 5)

    x = jax.random.normal(kx, (B, C, L), dtype=jnp.float32)
    s1 = 1.0 / math.sqrt(C * K)
    w1 = jax.random.uniform(kw1, (C1, C, K), jnp.float32, -s1, s1)
    b1 = jax.random.uniform(kb1, (C1,), jnp.float32, -s1, s1)
    s2 = 1.0 / math.sqrt(C1 * K)
    w2 = jax.random.uniform(kw2, (C2, C1, K), jnp.float32, -s2, s2)
    b2 = jax.random.uniform(kb2, (C2,), jnp.float32, -s2, s2)

    out = conv_block(x, w1, b1, w2, b2)
    out = jax.block_until_ready(out)

    ref = _ref_conv_block(x, w1, b1, w2, b2)
    assert out.shape == (B, C2, L - 4)
    # In-kernel dots use the default f32 MXU path; 1e-4 tolerances document the
    # (tiny) difference vs. the Precision.HIGHEST reference.
    assert jnp.allclose(out, ref, atol=1e-4, rtol=1e-4)

    print("KERNEL_OK")
</pallas_src>

<mosaic_0001>
module attributes {stable_mosaic.version = 11 : i64} {
  func.func @convblock_kernel(%arg0: i32, %arg1: memref<4x16x132xf32, #tpu.memory_space<vmem>>, %arg2: memref<8x48xf32, #tpu.memory_space<vmem>>, %arg3: memref<8x1xf32, #tpu.memory_space<vmem>>, %arg4: memref<4x24xf32, #tpu.memory_space<vmem>>, %arg5: memref<4x1xf32, #tpu.memory_space<vmem>>, %arg6: memref<4x4x128xf32, #tpu.memory_space<vmem>>) attributes {dimension_semantics = [#tpu.dimension_semantics<parallel>], iteration_bounds = array<i64: 2>, scalar_prefetch = 0 : i64, scratch_operands = 0 : i64, tpu.core_type = #tpu.core_type<tc>, window_params = [{transform_indices = @transform_0, window_bounds = array<i64: 4, 16, 132>}, {pipeline_mode = #tpu.pipeline_mode<synchronous>, transform_indices = @transform_1, window_bounds = array<i64: 8, 48>}, {pipeline_mode = #tpu.pipeline_mode<synchronous>, transform_indices = @transform_2, window_bounds = array<i64: 8, 1>}, {pipeline_mode = #tpu.pipeline_mode<synchronous>, transform_indices = @transform_3, window_bounds = array<i64: 4, 24>}, {pipeline_mode = #tpu.pipeline_mode<synchronous>, transform_indices = @transform_4, window_bounds = array<i64: 4, 1>}, {transform_indices = @transform_5, window_bounds = array<i64: 4, 4, 128>}]} {
    %c0 = arith.constant 0 : index
    %c0_0 = arith.constant 0 : index
    %c0_1 = arith.constant 0 : index
    %0 = vector.load %arg1[%c0, %c0_0, %c0_1] : memref<4x16x132xf32, #tpu.memory_space<vmem>>, vector<1x16x132xf32>
    %1 = vector.shape_cast %0 : vector<1x16x132xf32> to vector<16x132xf32>
    %c1 = arith.constant 1 : index
    %c0_2 = arith.constant 0 : index
    %c0_3 = arith.constant 0 : index
    %2 = vector.load %arg1[%c1, %c0_2, %c0_3] : memref<4x16x132xf32, #tpu.memory_space<vmem>>, vector<1x16x132xf32>
    %3 = vector.shape_cast %2 : vector<1x16x132xf32> to vector<16x132xf32>
    %c2 = arith.constant 2 : index
    %c0_4 = arith.constant 0 : index
    %c0_5 = arith.constant 0 : index
    %4 = vector.load %arg1[%c2, %c0_4, %c0_5] : memref<4x16x132xf32, #tpu.memory_space<vmem>>, vector<1x16x132xf32>
    %5 = vector.shape_cast %4 : vector<1x16x132xf32> to vector<16x132xf32>
    %c3 = arith.constant 3 : index
    %c0_6 = arith.constant 0 : index
    %c0_7 = arith.constant 0 : index
    %6 = vector.load %arg1[%c3, %c0_6, %c0_7] : memref<4x16x132xf32, #tpu.memory_space<vmem>>, vector<1x16x132xf32>
    %7 = vector.shape_cast %6 : vector<1x16x132xf32> to vector<16x132xf32>
    %8 = vector.extract_strided_slice %1 {offsets = [0, 0], sizes = [16, 130], strides = [1, 1]} : vector<16x132xf32> to vector<16x130xf32>
    %9 = vector.extract_strided_slice %3 {offsets = [0, 0], sizes = [16, 130], strides = [1, 1]} : vector<16x132xf32> to vector<16x130xf32>
    %10 = vector.extract_strided_slice %5 {offsets = [0, 0], sizes = [16, 130], strides = [1, 1]} : vector<16x132xf32> to vector<16x130xf32>
    %11 = vector.extract_strided_slice %7 {offsets = [0, 0], sizes = [16, 130], strides = [1, 1]} : vector<16x132xf32> to vector<16x130xf32>
    %12 = tpu.concatenate %8, %9, %10, %11 in 1 : vector<16x130xf32>, vector<16x130xf32>, vector<16x130xf32>, vector<16x130xf32> -> vector<16x520xf32>
    %13 = vector.extract_strided_slice %1 {offsets = [0, 1], sizes = [16, 130], strides = [1, 1]} : vector<16x132xf32> to vector<16x130xf32>
    %14 = vector.extract_strided_slice %3 {offsets = [0, 1], sizes = [16, 130], strides = [1, 1]} : vector<16x132xf32> to vector<16x130xf32>
    %15 = vector.extract_strided_slice %5 {offsets = [0, 1], sizes = [16, 130], strides = [1, 1]} : vector<16x132xf32> to vector<16x130xf32>
    %16 = vector.extract_strided_slice %7 {offsets = [0, 1], sizes = [16, 130], strides = [1, 1]} : vector<16x132xf32> to vector<16x130xf32>
    %17 = tpu.concatenate %13, %14, %15, %16 in 1 : vector<16x130xf32>, vector<16x130xf32>, vector<16x130xf32>, vector<16x130xf32> -> vector<16x520xf32>
    %18 = vector.extract_strided_slice %1 {offsets = [0, 2], sizes = [16, 130], strides = [1, 1]} : vector<16x132xf32> to vector<16x130xf32>
    %19 = vector.extract_strided_slice %3 {offsets = [0, 2], sizes = [16, 130], strides = [1, 1]} : vector<16x132xf32> to vector<16x130xf32>
    %20 = vector.extract_strided_slice %5 {offsets = [0, 2], sizes = [16, 130], strides = [1, 1]} : vector<16x132xf32> to vector<16x130xf32>
    %21 = vector.extract_strided_slice %7 {offsets = [0, 2], sizes = [16, 130], strides = [1, 1]} : vector<16x132xf32> to vector<16x130xf32>
    %22 = tpu.concatenate %18, %19, %20, %21 in 1 : vector<16x130xf32>, vector<16x130xf32>, vector<16x130xf32>, vector<16x130xf32> -> vector<16x520xf32>
    %23 = tpu.concatenate %12, %17, %22 in 0 : vector<16x520xf32>, vector<16x520xf32>, vector<16x520xf32> -> vector<48x520xf32>
    %c0_8 = arith.constant 0 : index
    %c0_9 = arith.constant 0 : index
    %24 = vector.load %arg2[%c0_8, %c0_9] : memref<8x48xf32, #tpu.memory_space<vmem>>, vector<8x48xf32>
    %cst = arith.constant dense<0.000000e+00> : vector<8x520xf32>
    %25 = tpu.matmul %24, %23, %cst {dimension_numbers = #tpu.dot_dimension_numbers<[1], [0], [0], [1], [0, 0, 1, 1], [], []>} : vector<8x48xf32>, vector<48x520xf32>, vector<8x520xf32> -> vector<8x520xf32>
    %c0_10 = arith.constant 0 : index
    %c0_11 = arith.constant 0 : index
    %26 = vector.load %arg3[%c0_10, %c0_11] : memref<8x1xf32, #tpu.memory_space<vmem>>, vector<8x1xf32>
    %27 = vector.broadcast %26 : vector<8x1xf32> to vector<8x520xf32>
    %28 = arith.addf %25, %27 : vector<8x520xf32>
    %cst_12 = arith.constant 0.000000e+00 : f32
    %29 = vector.broadcast %cst_12 : f32 to vector<8x520xf32>
    %30 = arith.maximumf %28, %29 : vector<8x520xf32>
    %31 = vector.extract_strided_slice %30 {offsets = [0, 0], sizes = [8, 128], strides = [1, 1]} : vector<8x520xf32> to vector<8x128xf32>
    %32 = vector.extract_strided_slice %30 {offsets = [0, 130], sizes = [8, 128], strides = [1, 1]} : vector<8x520xf32> to vector<8x128xf32>
    %33 = vector.extract_strided_slice %30 {offsets = [0, 260], sizes = [8, 128], strides = [1, 1]} : vector<8x520xf32> to vector<8x128xf32>
    %34 = vector.extract_strided_slice %30 {offsets = [0, 390], sizes = [8, 128], strides = [1, 1]} : vector<8x520xf32> to vector<8x128xf32>
    %35 = tpu.concatenate %31, %32, %33, %34 in 1 : vector<8x128xf32>, vector<8x128xf32>, vector<8x128xf32>, vector<8x128xf32> -> vector<8x512xf32>
    %36 = vector.extract_strided_slice %30 {offsets = [0, 1], sizes = [8, 128], strides = [1, 1]} : vector<8x520xf32> to vector<8x128xf32>
    %37 = vector.extract_strided_slice %30 {offsets = [0, 131], sizes = [8, 128], strides = [1, 1]} : vector<8x520xf32> to vector<8x128xf32>
    %38 = vector.extract_strided_slice %30 {offsets = [0, 261], sizes = [8, 128], strides = [1, 1]} : vector<8x520xf32> to vector<8x128xf32>
    %39 = vector.extract_strided_slice %30 {offsets = [0, 391], sizes = [8, 128], strides = [1, 1]} : vector<8x520xf32> to vector<8x128xf32>
    %40 = tpu.concatenate %36, %37, %38, %39 in 1 : vector<8x128xf32>, vector<8x128xf32>, vector<8x128xf32>, vector<8x128xf32> -> vector<8x512xf32>
    %41 = vector.extract_strided_slice %30 {offsets = [0, 2], sizes = [8, 128], strides = [1, 1]} : vector<8x520xf32> to vector<8x128xf32>
    %42 = vector.extract_strided_slice %30 {offsets = [0, 132], sizes = [8, 128], strides = [1, 1]} : vector<8x520xf32> to vector<8x128xf32>
    %43 = vector.extract_strided_slice %30 {offsets = [0, 262], sizes = [8, 128], strides = [1, 1]} : vector<8x520xf32> to vector<8x128xf32>
    %44 = vector.extract_strided_slice %30 {offsets = [0, 392], sizes = [8, 128], strides = [1, 1]} : vector<8x520xf32> to vector<8x128xf32>
    %45 = tpu.concatenate %41, %42, %43, %44 in 1 : vector<8x128xf32>, vector<8x128xf32>, vector<8x128xf32>, vector<8x128xf32> -> vector<8x512xf32>
    %46 = tpu.concatenate %35, %40, %45 in 0 : vector<8x512xf32>, vector<8x512xf32>, vector<8x512xf32> -> vector<24x512xf32>
    %c0_13 = arith.constant 0 : index
    %c0_14 = arith.constant 0 : index
    %47 = vector.load %arg4[%c0_13, %c0_14] : memref<4x24xf32, #tpu.memory_space<vmem>>, vector<4x24xf32>
    %cst_15 = arith.constant dense<0.000000e+00> : vector<4x512xf32>
    %48 = tpu.matmul %47, %46, %cst_15 {dimension_numbers = #tpu.dot_dimension_numbers<[1], [0], [0], [1], [0, 0, 1, 1], [], []>} : vector<4x24xf32>, vector<24x512xf32>, vector<4x512xf32> -> vector<4x512xf32>
    %c0_16 = arith.constant 0 : index
    %c0_17 = arith.constant 0 : index
    %49 = vector.load %arg5[%c0_16, %c0_17] : memref<4x1xf32, #tpu.memory_space<vmem>>, vector<4x1xf32>
    %50 = vector.broadcast %49 : vector<4x1xf32> to vector<4x512xf32>
    %51 = arith.addf %48, %50 : vector<4x512xf32>
    %cst_18 = arith.constant 0.000000e+00 : f32
    %52 = vector.broadcast %cst_18 : f32 to vector<4x512xf32>
    %53 = arith.maximumf %51, %52 : vector<4x512xf32>
    %54 = vector.extract_strided_slice %53 {offsets = [0, 0], sizes = [4, 128], strides = [1, 1]} : vector<4x512xf32> to vector<4x128xf32>
    %c0_19 = arith.constant 0 : index
    %c0_20 = arith.constant 0 : index
    %c0_21 = arith.constant 0 : index
    %55 = vector.load %arg6[%c0_19, %c0_20, %c0_21] : memref<4x4x128xf32, #tpu.memory_space<vmem>>, vector<1x4x128xf32>
    %56 = vector.shape_cast %55 : vector<1x4x128xf32> to vector<4x128xf32>
    %57 = vector.shape_cast %54 : vector<4x128xf32> to vector<1x4x128xf32>
    tpu.vector_store %arg6[%c0_19, %c0_20, %c0_21], %57 {strides = array<i32>} : memref<4x4x128xf32, #tpu.memory_space<vmem>>, vector<1x4x128xf32>,
    %58 = vector.extract_strided_slice %53 {offsets = [0, 128], sizes = [4, 128], strides = [1, 1]} : vector<4x512xf32> to vector<4x128xf32>
    %c1_22 = arith.constant 1 : index
    %c0_23 = arith.constant 0 : index
    %c0_24 = arith.constant 0 : index
    %59 = vector.load %arg6[%c1_22, %c0_23, %c0_24] : memref<4x4x128xf32, #tpu.memory_space<vmem>>, vector<1x4x128xf32>
    %60 = vector.shape_cast %59 : vector<1x4x128xf32> to vector<4x128xf32>
    %61 = vector.shape_cast %58 : vector<4x128xf32> to vector<1x4x128xf32>
    tpu.vector_store %arg6[%c1_22, %c0_23, %c0_24], %61 {strides = array<i32>} : memref<4x4x128xf32, #tpu.memory_space<vmem>>, vector<1x4x128xf32>,
    %62 = vector.extract_strided_slice %53 {offsets = [0, 256], sizes = [4, 128], strides = [1, 1]} : vector<4x512xf32> to vector<4x128xf32>
    %c2_25 = arith.constant 2 : index
    %c0_26 = arith.constant 0 : index
    %c0_27 = arith.constant 0 : index
    %63 = vector.load %arg6[%c2_25, %c0_26, %c0_27] : memref<4x4x128xf32, #tpu.memory_space<vmem>>, vector<1x4x128xf32>
    %64 = vector.shape_cast %63 : vector<1x4x128xf32> to vector<4x128xf32>
    %65 = vector.shape_cast %62 : vector<4x128xf32> to vector<1x4x128xf32>
    tpu.vector_store %arg6[%c2_25, %c0_26, %c0_27], %65 {strides = array<i32>} : memref<4x4x128xf32, #tpu.memory_space<vmem>>, vector<1x4x128xf32>,
    %66 = vector.extract_strided_slice %53 {offsets = [0, 384], sizes = [4, 128], strides = [1, 1]} : vector<4x512xf32> to vector<4x128xf32>
    %c3_28 = arith.constant 3 : index
    %c0_29 = arith.constant 0 : index
    %c0_30 = arith.constant 0 : index
    %67 = vector.load %arg6[%c3_28, %c0_29, %c0_30] : memref<4x4x128xf32, #tpu.memory_space<vmem>>, vector<1x4x128xf32>
    %68 = vector.shape_cast %67 : vector<1x4x128xf32> to vector<4x128xf32>
    %69 = vector.shape_cast %66 : vector<4x128xf32> to vector<1x4x128xf32>
    tpu.vector_store %arg6[%c3_28, %c0_29, %c0_30], %69 {strides = array<i32>} : memref<4x4x128xf32, #tpu.memory_space<vmem>>, vector<1x4x128xf32>,
    return
  }
  func.func @transform_0(%arg0: i32) -> (i32, i32, i32) {
    %c0_i32 = arith.constant 0 : i32
    %c0_i32_0 = arith.constant 0 : i32
    %c0_i32_1 = arith.constant 0 : i32
    return %arg0, %c0_i32, %c0_i32_0 : i32, i32, i32
  }
  func.func @transform_1(%arg0: i32) -> (i32, i32) {
    %c0_i32 = arith.constant 0 : i32
    %c0_i32_0 = arith.constant 0 : i32
    %c0_i32_1 = arith.constant 0 : i32
    return %c0_i32, %c0_i32_0 : i32, i32
  }
  func.func @transform_2(%arg0: i32) -> (i32, i32) {
    %c0_i32 = arith.constant 0 : i32
    %c0_i32_0 = arith.constant 0 : i32
    %c0_i32_1 = arith.constant 0 : i32
    return %c0_i32, %c0_i32_0 : i32, i32
  }
  func.func @transform_3(%arg0: i32) -> (i32, i32) {
    %c0_i32 = arith.constant 0 : i32
    %c0_i32_0 = arith.constant 0 : i32
    %c0_i32_1 = arith.constant 0 : i32
    return %c0_i32, %c0_i32_0 : i32, i32
  }
  func.func @transform_4(%arg0: i32) -> (i32, i32) {
    %c0_i32 = arith.constant 0 : i32
    %c0_i32_0 = arith.constant 0 : i32
    %c0_i32_1 = arith.constant 0 : i32
    return %c0_i32, %c0_i32_0 : i32, i32
  }
  func.func @transform_5(%arg0: i32) -> (i32, i32, i32) {
    %c0_i32 = arith.constant 0 : i32
    %c0_i32_0 = arith.constant 0 : i32
    %c0_i32_1 = arith.constant 0 : i32
    return %arg0, %c0_i32, %c0_i32_0 : i32, i32, i32
  }
}

</mosaic_0001>

<llo_original>
// kernel: tpu_custom_call.1
$region0: #{tpu_custom_call.1}
  #allocation0 [shape = 'u32[]', space=smem, size = 0x4, offset = 0x4, fixed_abs, tag = 'smem constant byte address 0x4 - core index']
  #allocation1 [shape = 'u32[144,128]{1,0:T(1,128)}', space=vmem, size = 0x12000, scoped, tag = 'internal scratch']
  %s0 = inlined_call_operand.hbm [shape: f32[8,16,132], index: 0, kind: input, shape index: {}]
  %s1 = inlined_call_operand.vmem [shape: f32[8,48], index: 1, kind: input, shape index: {}]
  %s2 = inlined_call_operand.vmem [shape: f32[8,1], index: 2, kind: input, shape index: {}]
  %s3 = inlined_call_operand.vmem [shape: f32[4,24], index: 3, kind: input, shape index: {}]
  %s4 = inlined_call_operand.vmem [shape: f32[4,1], index: 4, kind: input, shape index: {}]
  %s5 = inlined_call_operand.hbm [shape: f32[8,4,128], index: 5, kind: output, shape index: {}]
  %s6 = sld [smem:[#allocation0]]
  $region57: #{tpu_custom_call.1} parent=0
    _
  %s8 = ssub.s32 1, %s6
  %s9 = scalar_select 0, %s8, %s6
  $region1: #{tpu_custom_call.1} parent=0
    #allocation2 [shape = 'u8[131072]{0}', space=vmem, size = 0x20000, scoped, tag = 'input window, operand 0']
    #allocation3 [shape = 's32[2]{0}', space=sflag, size = 0x8, scoped, tag = 'scoped memory for tpu_custom_call.1']
    #allocation4 [shape = 's32[2]{0}', space=sflag, size = 0x8, scoped, tag = 'scoped memory for tpu_custom_call.1']
    #allocation5 [shape = 'u8[16384]{0}', space=vmem, size = 0x4000, scoped, tag = 'output window, operand 0']
    %10 = vsyncpa [#allocation3], 0
    %s11 = scalar_lea.sflag [#allocation3], 1
    %12 = vsyncpa %s11, 0
    %13 = vsyncpa [#allocation4], 0
    %s14 = scalar_lea.sflag [#allocation4], 1
    %15 = vsyncpa %s14, 0
    loop: start=0, step=1, limit=4
    $region2: #{tpu_custom_call.1} parent=1 // loop_pre_header
      _
    $region3: #{tpu_custom_call.1} parent=1 // loop_header
      %s17 = sphi 0, %s21
      %p18 = scmp.ge.s32.totalorder %s17, 4
      %s27 = sphi 0, %s29
      %s30 = sphi 0, %s27
      %s31 = sphi 0, %s30
      %s47 = sphi 0, %s31
      %s51 = sphi 0, %s51
      %s53 = sphi 0, %s51
      %s54 = sphi 0, %s53
      %s68 = sphi 0, %s54
      %s72 = sphi 0, %s72
      %s74 = sphi 0, %s72
      %s75 = sphi 0, %s74
      %s89 = sphi 0, %s75
      %s93 = sphi 0, %s93
      %s95 = sphi 0, %s93
      %s96 = sphi 0, %s95
      %s110 = sphi 0, %s96
      %s114 = sphi 0, %s114
      %s116 = sphi 0, %s114
      %s117 = sphi 0, %s116
      %s131 = sphi 0, %s117
      %s137 = sphi 0, %s139
      %s140 = sphi 0, %s137
      %s141 = sphi 0, %s140
      %s157 = sphi 0, %s141
    $region4: #{tpu_custom_call.1} parent=1 // loop_header_branch
      %20 = sbr.rel (%p18) target = $region8
    $region5: #{tpu_custom_call.1} parent=1 // loop_body
      %s22 = ssub.s32 %s17, 1
      %s23 = ssub.s32 %s17, 2
      %s24 = sadd.s32 %s17, 1
      %s25 = ssub.s32 %s17, %s24
      %p26 = scmp.eq.s32.totalorder %s25, 0
      %s28 = sadd.s32 %s27, 1
      %s29 = scalar_select %p26, %s27, %s28
      %p32 = pneg %p26
      %p33 = scmp.eq.s32.totalorder %s17, 1
      %p34 = por %p32, %p33
      %p35 = scmp.ne.s32.totalorder %s27, %s30
      %p36 = scmp.eq.s32.totalorder %s17, 0
      %p37 = por %p35, %p36
      %p38 = scmp.ne.s32.totalorder %s27, %s30
      %p39 = scmp.eq.s32.totalorder %s22, 1
      %p40 = por %p38, %p39
      %p41 = scmp.ne.s32.totalorder %s30, %s31
      %p42 = scmp.eq.s32.totalorder %s22, 0
      %p43 = por %p41, %p42
      %p44 = scmp.ne.s32.totalorder %s30, %s31
      %p45 = scmp.eq.s32.totalorder %s23, 1
      %p46 = por %p44, %p45
      %p48 = scmp.ne.s32.totalorder %s31, %s47
      %p49 = scmp.eq.s32.totalorder %s23, 0
      %p50 = por %p48, %p49
      %s52 = sadd.s32 %s51, 1
      %p55 = scmp.eq.s32.totalorder %s17, 1
      %p56 = scmp.ne.s32.totalorder %s51, %s53
      %p57 = scmp.eq.s32.totalorder %s17, 0
      %p58 = por %p56, %p57
      %p59 = scmp.ne.s32.totalorder %s51, %s53
      %p60 = scmp.eq.s32.totalorder %s22, 1
      %p61 = por %p59, %p60
      %p62 = scmp.ne.s32.totalorder %s53, %s54
      %p63 = scmp.eq.s32.totalorder %s22, 0
      %p64 = por %p62, %p63
      %p65 = scmp.ne.s32.totalorder %s53, %s54
      %p66 = scmp.eq.s32.totalorder %s23, 1
      %p67 = por %p65, %p66
      %p69 = scmp.ne.s32.totalorder %s54, %s68
      %p70 = scmp.eq.s32.totalorder %s23, 0
      %p71 = por %p69, %p70
      %s73 = sadd.s32 %s72, 1
      %p76 = scmp.eq.s32.totalorder %s17, 1
      %p77 = scmp.ne.s32.totalorder %s72, %s74
      %p78 = scmp.eq.s32.totalorder %s17, 0
      %p79 = por %p77, %p78
      %p80 = scmp.ne.s32.totalorder %s72, %s74
      %p81 = scmp.eq.s32.totalorder %s22, 1
      %p82 = por %p80, %p81
      %p83 = scmp.ne.s32.totalorder %s74, %s75
      %p84 = scmp.eq.s32.totalorder %s22, 0
      %p85 = por %p83, %p84
      %p86 = scmp.ne.s32.totalorder %s74, %s75
      %p87 = scmp.eq.s32.totalorder %s23, 1
      %p88 = por %p86, %p87
      %p90 = scmp.ne.s32.totalorder %s75, %s89
      %p91 = scmp.eq.s32.totalorder %s23, 0
      %p92 = por %p90, %p91
      %s94 = sadd.s32 %s93, 1
      %p97 = scmp.eq.s32.totalorder %s17, 1
      %p98 = scmp.ne.s32.totalorder %s93, %s95
      %p99 = scmp.eq.s32.totalorder %s17, 0
      %p100 = por %p98, %p99
      %p101 = scmp.ne.s32.totalorder %s93, %s95
      %p102 = scmp.eq.s32.totalorder %s22, 1
      %p103 = por %p101, %p102
      %p104 = scmp.ne.s32.totalorder %s95, %s96
      %p105 = scmp.eq.s32.totalorder %s22, 0
      %p106 = por %p104, %p105
      %p107 = scmp.ne.s32.totalorder %s95, %s96
      %p108 = scmp.eq.s32.totalorder %s23, 1
      %p109 = por %p107, %p108
      %p111 = scmp.ne.s32.totalorder %s96, %s110
      %p112 = scmp.eq.s32.totalorder %s23, 0
      %p113 = por %p111, %p112
      %s115 = sadd.s32 %s114, 1
      %p118 = scmp.eq.s32.totalorder %s17, 1
      %p119 = scmp.ne.s32.totalorder %s114, %s116
      %p120 = scmp.eq.s32.totalorder %s17, 0
      %p121 = por %p119, %p120
      %p122 = scmp.ne.s32.totalorder %s114, %s116
      %p123 = scmp.eq.s32.totalorder %s22, 1
      %p124 = por %p122, %p123
      %p125 = scmp.ne.s32.totalorder %s116, %s117
      %p126 = scmp.eq.s32.totalorder %s22, 0
      %p127 = por %p125, %p126
      %p128 = scmp.ne.s32.totalorder %s116, %s117
      %p129 = scmp.eq.s32.totalorder %s23, 1
      %p130 = por %p128, %p129
      %p132 = scmp.ne.s32.totalorder %s117, %s131
      %p133 = scmp.eq.s32.totalorder %s23, 0
      %p134 = por %p132, %p133
      %s135 = ssub.s32 %s17, %s24
      %p136 = scmp.eq.s32.totalorder %s135, 0
      %s138 = sadd.s32 %s137, 1
      %s139 = scalar_select %p136, %s137, %s138
      %p142 = pneg %p136
      %p143 = scmp.eq.s32.totalorder %s17, 1
      %p144 = por %p142, %p143
      %p145 = scmp.ne.s32.totalorder %s137, %s140
      %p146 = scmp.eq.s32.totalorder %s17, 0
      %p147 = por %p145, %p146
      %p148 = scmp.ne.s32.totalorder %s137, %s140
      %p149 = scmp.eq.s32.totalorder %s22, 1
      %p150 = por %p148, %p149
      %p151 = scmp.ne.s32.totalorder %s140, %s141
      %p152 = scmp.eq.s32.totalorder %s22, 0
      %p153 = por %p151, %p152
      %p154 = scmp.ne.s32.totalorder %s140, %s141
      %p155 = scmp.eq.s32.totalorder %s23, 1
      %p156 = por %p154, %p155
      %p158 = scmp.ne.s32.totalorder %s141, %s157
      %p159 = scmp.eq.s32.totalorder %s23, 0
      %p160 = por %p158, %p159
      %p161 = scmp.le.s32.totalorder 1, %s17
      %p162 = scmp.lt.s32.totalorder %s17, 3
      %p163 = pnand %p161, %p162
      %p164 = pneg %p163
      // Predicated region
      $region9: #{tpu_custom_call.1} parent=5 // pred_check
        _
      $region10: #{tpu_custom_call.1} parent=5 // pred_check_branch
        %166 = sbr.rel (%p163) target = $region12
      $region11: #{tpu_custom_call.1} parent=5 // pred_region
        %s167 = ssub.s32 %s17, 1
        // Predicated region
        $region13: #{tpu_custom_call.1} parent=11 // pred_check
          %p168 = pneg %p64
        $region14: #{tpu_custom_call.1} parent=11 // pred_check_branch
          %170 = sbr.rel (%p168) target = $region16
        $region15: #{tpu_custom_call.1} parent=11 // pred_region
          _
        $region16: #{tpu_custom_call.1} parent=11 // pred_fallthru
          _
        // Predicated region
        $region17: #{tpu_custom_call.1} parent=11 // pred_check
          %p171 = pneg %p85
        $region18: #{tpu_custom_call.1} parent=11 // pred_check_branch
          %173 = sbr.rel (%p171) target = $region20
        $region19: #{tpu_custom_call.1} parent=11 // pred_region
          _
        $region20: #{tpu_custom_call.1} parent=11 // pred_fallthru
          _
        // Predicated region
        $region21: #{tpu_custom_call.1} parent=11 // pred_check
          %p174 = pneg %p106
        $region22: #{tpu_custom_call.1} parent=11 // pred_check_branch
          %176 = sbr.rel (%p174) target = $region24
        $region23: #{tpu_custom_call.1} parent=11 // pred_region
          _
        $region24: #{tpu_custom_call.1} parent=11 // pred_fallthru
          _
        // Predicated region
        $region25: #{tpu_custom_call.1} parent=11 // pred_check
          %p177 = pneg %p127
        $region26: #{tpu_custom_call.1} parent=11 // pred_check_branch
          %179 = sbr.rel (%p177) target = $region28
        $region27: #{tpu_custom_call.1} parent=11 // pred_region
          _
        $region28: #{tpu_custom_call.1} parent=11 // pred_fallthru
          _
      $region12: #{tpu_custom_call.1} parent=5 // pred_fallthru
        _
      %p180 = scmp.lt.s32.totalorder %s17, 2
      // Predicated region
      $region29: #{tpu_custom_call.1} parent=5 // pred_check
        %p181 = pneg %p180
      $region30: #{tpu_custom_call.1} parent=5 // pred_check_branch
        %183 = sbr.rel (%p181) target = $region32
      $region31: #{tpu_custom_call.1} parent=5 // pred_region
        // Predicated region
        $region33: #{tpu_custom_call.1} parent=31 // pred_check
          %p184 = pneg %p37
        $region34: #{tpu_custom_call.1} parent=31 // pred_check_branch
          %186 = sbr.rel (%p184) target = $region36
        $region35: #{tpu_custom_call.1} parent=31 // pred_region
          %s187 = sand.u32 %s27, 1
          %s188 = scalar_lea.sflag [#allocation3], %s187
          %s189 = sand.u32 %s27, 1
          %s190 = smul.addr %s189, 128
          %s191 = scalar_lea.vmem [#allocation2], %s190
          %s192 = smul.u32 4, %s17
          %s194 = ssub.s32 2048, 2048
          %195 = vsyncadd %s188, %s194
          %s196 = smul.addr %s192, 4
          %s197 = smul.addr %s196, 128
          %s198 = scalar_lea.hbm %s0, %s197
          %s199 = sshll.u32 %s191, 4
          %s200 = int_to_ptr.vmem [resolvable:$true] %s199
          %205 = dma.hbm_to_vmem [thread:$0]  %s198, 2048, %s200, %s188, 256, 256, 16
        $region36: #{tpu_custom_call.1} parent=31 // pred_fallthru
          _
      $region32: #{tpu_custom_call.1} parent=5 // pred_fallthru
        _
      %p206 = scmp.le.s32.totalorder 1, %s17
      %p207 = scmp.lt.s32.totalorder %s17, 3
      %p208 = pnand %p206, %p207
      %p209 = pneg %p208
      // Predicated region
      $region37: #{tpu_custom_call.1} parent=5 // pred_check
        _
      $region38: #{tpu_custom_call.1} parent=5 // pred_check_branch
        %211 = sbr.rel (%p208) target = $region40
      $region39: #{tpu_custom_call.1} parent=5 // pred_region
        %s212 = ssub.s32 %s17, 1
        %s213 = sand.u32 %s30, 1
        %s214 = scalar_lea.sflag [#allocation3], %s213
        %s215 = sand.u32 %s30, 1
        %s216 = smul.addr %s215, 128
        %s217 = scalar_lea.vmem [#allocation2], %s216
        // Predicated region
        $region41: #{tpu_custom_call.1} parent=39 // pred_check
          %p218 = pneg %p43
        $region42: #{tpu_custom_call.1} parent=39 // pred_check_branch
          %220 = sbr.rel (%p218) target = $region44
        $region43: #{tpu_custom_call.1} parent=39 // pred_region
          %221 = dma.done %s214, 2048
        $region44: #{tpu_custom_call.1} parent=39 // pred_fallthru
          _
        %s222 = sand.u32 %s30, 1
        %s223 = scalar_lea.sflag [#allocation3], %s222
        %s224 = sand.u32 %s30, 1
        %s225 = smul.addr %s224, 128
        %s226 = scalar_lea.vmem [#allocation2], %s225
        %p227 = pneg %p43
        %p228 = pneg %p40
        %p229 = pneg %p64
        %p230 = pneg %p61
        %p231 = pneg %p85
        %p232 = pneg %p82
        %p233 = pneg %p106
        %p234 = pneg %p103
        %p235 = pneg %p127
        %p236 = pneg %p124
        %p237 = pneg %p153
        %p238 = pneg %p150
        %s239 = sand.u32 %s140, 1
        %s240 = scalar_lea.sflag [#allocation4], %s239
        %s241 = sand.u32 %s140, 1
        %s242 = smul.addr %s241, 16
        %s243 = scalar_lea.vmem [#allocation5], %s242
        %s244 = smul.u32 4, %s22
        %s245 = smul.u32 4, %s22
        %v246 = vld [vmem:[%s217] sm:$0xff]
        %v247 = vld [vmem:[%s217 + $0x8] sm:$0xff]
        %v248 = vld [vmem:[%s217 + $0x10] sm:$0xff]
        %v249 = vld [vmem:[%s217 + $0x18] sm:$0xff]
        %s250 = scalar_lea.vmem %s217, 32 [#allocation2]
        %v251 = vld [vmem:[%s250] sm:$0xff]
        %v252 = vld [vmem:[%s250 + $0x8] sm:$0xff]
        %v253 = vld [vmem:[%s250 + $0x10] sm:$0xff]
        %v254 = vld [vmem:[%s250 + $0x18] sm:$0xff]
        %s255 = scalar_lea.vmem %s217, 64 [#allocation2]
        %v256 = vld [vmem:[%s255] sm:$0xff]
        %v257 = vld [vmem:[%s255 + $0x8] sm:$0xff]
        %v258 = vld [vmem:[%s255 + $0x10] sm:$0xff]
        %v259 = vld [vmem:[%s255 + $0x18] sm:$0xff]
        %s260 = scalar_lea.vmem %s217, 96 [#allocation2]
        %v261 = vld [vmem:[%s260] sm:$0xff]
        %v262 = vld [vmem:[%s260 + $0x8] sm:$0xff]
        %v263 = vld [vmem:[%s260 + $0x10] sm:$0xff]
        %v264 = vld [vmem:[%s260 + $0x18] sm:$0xff]
        %269 = vrot.lane.b32.xlu0 %v251, 2
        %v270 = vpop.permute.xlu0 %269
        %271 = vrot.lane.b32.xlu0 %v252, 2
        %v272 = vpop.permute.xlu0 %271
        %273 = vrot.lane.b32.xlu0 %v253, 2
        %v274 = vpop.permute.xlu0 %273
        %275 = vrot.lane.b32.xlu0 %v254, 2
        %v276 = vpop.permute.xlu0 %275
        %vm277 = vcmask 15360
        %v278 = vsel %vm277, %v270, %v272
        %v279 = vsel %vm277, %v274, %v276
        %288 = vrot.lane.b32.xlu0 %v256, 4
        %v289 = vpop.permute.xlu0 %288
        %290 = vrot.lane.b32.xlu0 %v257, 4
        %v291 = vpop.permute.xlu0 %290
        %292 = vrot.lane.b32.xlu0 %v258, 4
        %v293 = vpop.permute.xlu0 %292
        %294 = vrot.lane.b32.xlu0 %v259, 4
        %v295 = vpop.permute.xlu0 %294
        %vm296 = vcmask 31744
        %v297 = vsel %vm296, %v289, %v291
        %v298 = vsel %vm296, %v293, %v295
        %307 = vrot.lane.b32.xlu0 %v261, 6
        %v308 = vpop.permute.xlu0 %307
        %309 = vrot.lane.b32.xlu0 %v262, 6
        %v310 = vpop.permute.xlu0 %309
        %311 = vrot.lane.b32.xlu0 %v263, 6
        %v312 = vpop.permute.xlu0 %311
        %313 = vrot.lane.b32.xlu0 %v264, 6
        %v314 = vpop.permute.xlu0 %313
        %vm315 = vcmask 48128
        %v316 = vsel %vm315, %v308, %v310
        %v317 = vsel %vm315, %v312, %v314
        %v322 = vsel %vm277, %v247, %v270
        %v323 = vsel %vm277, %v249, %v274
        %v324 = vsel %vm296, %v278, %v289
        %v325 = vsel %vm296, %v279, %v293
        %v326 = vsel %vm315, %v297, %v308
        %v327 = vsel %vm315, %v298, %v312
        %332 = vrot.lane.b32.xlu0 %v246, 127
        %v333 = vpop.permute.xlu0 %332
        %334 = vrot.lane.b32.xlu0 %v247, 127
        %v335 = vpop.permute.xlu0 %334
        %336 = vrot.lane.b32.xlu0 %v248, 127
        %v337 = vpop.permute.xlu0 %336
        %338 = vrot.lane.b32.xlu0 %v249, 127
        %v339 = vpop.permute.xlu0 %338
        %vm340 = vcmask 1039360
        %v341 = vsel %vm340, %v333, %v335
        %v342 = vsel %vm340, %v337, %v339
        %347 = vrot.lane.b32.xlu0 %v251, 1
        %v348 = vpop.permute.xlu0 %347
        %349 = vrot.lane.b32.xlu0 %v252, 1
        %v350 = vpop.permute.xlu0 %349
        %351 = vrot.lane.b32.xlu0 %v253, 1
        %v352 = vpop.permute.xlu0 %351
        %353 = vrot.lane.b32.xlu0 %v254, 1
        %v354 = vpop.permute.xlu0 %353
        %vm355 = vcmask 7168
        %v356 = vsel %vm355, %v348, %v350
        %v357 = vsel %vm355, %v352, %v354
        %362 = vrot.lane.b32.xlu0 %v256, 3
        %v363 = vpop.permute.xlu0 %362
        %364 = vrot.lane.b32.xlu0 %v257, 3
        %v365 = vpop.permute.xlu0 %364
        %366 = vrot.lane.b32.xlu0 %v258, 3
        %v367 = vpop.permute.xlu0 %366
        %368 = vrot.lane.b32.xlu0 %v259, 3
        %v369 = vpop.permute.xlu0 %368
        %vm370 = vcmask 23552
        %v371 = vsel %vm370, %v363, %v365
        %v372 = vsel %vm370, %v367, %v369
        %377 = vrot.lane.b32.xlu0 %v261, 5
        %v378 = vpop.permute.xlu0 %377
        %379 = vrot.lane.b32.xlu0 %v262, 5
        %v380 = vpop.permute.xlu0 %379
        %381 = vrot.lane.b32.xlu0 %v263, 5
        %v382 = vpop.permute.xlu0 %381
        %383 = vrot.lane.b32.xlu0 %v264, 5
        %v384 = vpop.permute.xlu0 %383
        %vm385 = vcmask 39936
        %v386 = vsel %vm385, %v378, %v380
        %v387 = vsel %vm385, %v382, %v384
        %v392 = vsel %vm277, %v335, %v348
        %v393 = vsel %vm277, %v339, %v352
        %v394 = vsel %vm296, %v356, %v363
        %v395 = vsel %vm296, %v357, %v367
        %v396 = vsel %vm315, %v371, %v378
        %v397 = vsel %vm315, %v372, %v382
        %398 = vrot.lane.b32.xlu0 %v246, 126
        %v399 = vpop.permute.xlu0 %398
        %400 = vrot.lane.b32.xlu0 %v247, 126
        %v401 = vpop.permute.xlu0 %400
        %402 = vrot.lane.b32.xlu0 %v248, 126
        %v403 = vpop.permute.xlu0 %402
        %404 = vrot.lane.b32.xlu0 %v249, 126
        %v405 = vpop.permute.xlu0 %404
        %vm406 = vcmask 1031168
        %v407 = vsel %vm406, %v399, %v401
        %v408 = vsel %vm406, %v403, %v405
        %413 = vrot.lane.b32.xlu0 %v256, 2
        %v414 = vpop.permute.xlu0 %413
        %415 = vrot.lane.b32.xlu0 %v257, 2
        %v416 = vpop.permute.xlu0 %415
        %417 = vrot.lane.b32.xlu0 %v258, 2
        %v418 = vpop.permute.xlu0 %417
        %419 = vrot.lane.b32.xlu0 %v259, 2
        %v420 = vpop.permute.xlu0 %419
        %v421 = vsel %vm277, %v414, %v416
        %v422 = vsel %vm277, %v418, %v420
        %427 = vrot.lane.b32.xlu0 %v261, 4
        %v428 = vpop.permute.xlu0 %427
        %429 = vrot.lane.b32.xlu0 %v262, 4
        %v430 = vpop.permute.xlu0 %429
        %431 = vrot.lane.b32.xlu0 %v263, 4
        %v432 = vpop.permute.xlu0 %431
        %433 = vrot.lane.b32.xlu0 %v264, 4
        %v434 = vpop.permute.xlu0 %433
        %v435 = vsel %vm296, %v428, %v430
        %v436 = vsel %vm296, %v432, %v434
        %v441 = vsel %vm277, %v401, %v251
        %v442 = vsel %vm277, %v405, %v253
        %v443 = vsel %vm296, %v252, %v414
        %v444 = vsel %vm296, %v254, %v418
        %v445 = vsel %vm315, %v421, %v428
        %v446 = vsel %vm315, %v422, %v432
        %v447 = vld [vmem:[%s1] sm:$0xff]
        %v448 = vld [vmem:[%s2] sm:$0xff]
        %450 = vset.pattern.permute.xlu0 0
        %451 = vperm.xlu0 %450, %v448
        %v452 = vpop.permute.xlu0 %451
        %vm454 = vcmask 392192
        %v456 = vsel %vm454, %v447, 0
        %458 = vmatprep.subr.mxu0 0.0
        %459 = vmatpush1.msra.mxu0 0.0
        %460 = vmatprep.subr.mxu0 0.0
        %461 = vmatpush1.msra.mxu0 0.0
        %462 = vmatprep.subr.mxu0 0.0
        %463 = vmatpush1.msra.mxu0 0.0
        %464 = vmatprep.subr.mxu0 0.0
        %465 = vmatpush1.msra.mxu0 0.0
        %466 = vmatprep.subr.mxu0 0.0
        %467 = vmatpush1.msra.mxu0 0.0
        %468 = vmatprep.subr.mxu0 0.0
        %469 = vmatpush1.msra.mxu0 0.0
        %470 = vmatprep.subr.mxu0 0.0
        %471 = vmatpush1.msra.mxu0 0.0
        %472 = vmatprep.subr.mxu0 0.0
        %473 = vmatpush1.msra.mxu0 0.0
        %474 = vmatprep.subr.mxu0 0.0
        %475 = vmatpush1.msra.mxu0 0.0
        %476 = vmatprep.subr.mxu0 0.0
        %477 = vmatpush1.msra.mxu0 0.0
        %478 = vmatprep.subr.mxu0 %v442
        %479 = vmatpush1.msra.mxu0 %v408
        %480 = vmatprep.subr.mxu0 %v441
        %481 = vmatpush1.msra.mxu0 %v407
        %482 = vmatprep.subr.mxu0 %v393
        %483 = vmatpush1.msra.mxu0 %v342
        %484 = vmatprep.subr.mxu0 %v392
        %485 = vmatpush1.msra.mxu0 %v341
        %486 = vmatprep.subr.mxu0 %v323
        %487 = vmatpush1.msra.mxu0 %v248
        %488 = vmatprep.subr.mxu0 %v322
        %489 = vmatpush1.msra.mxu0 %v246
        %490 = vmatprep.subr.mxu0 0.0
        %491 = vmatpush2.msra.mxu0 0.0
        %492 = vmatprep.subr.mxu0 0.0
        %493 = vmatpush2.msra.mxu0 0.0
        %494 = vmatprep.subr.mxu0 0.0
        %495 = vmatpush2.msra.mxu0 0.0
        %496 = vmatprep.subr.mxu0 0.0
        %497 = vmatpush2.msra.mxu0 0.0
        %498 = vmatprep.subr.mxu0 0.0
        %499 = vmatpush2.msra.mxu0 0.0
        %500 = vmatprep.subr.mxu0 0.0
        %501 = vmatpush2.msra.mxu0 0.0
        %502 = vmatprep.subr.mxu0 0.0
        %503 = vmatpush2.msra.mxu0 0.0
        %504 = vmatprep.subr.mxu0 0.0
        %505 = vmatpush2.msra.mxu0 0.0
        %506 = vmatprep.subr.mxu0 0.0
        %507 = vmatpush2.msra.mxu0 0.0
        %508 = vmatprep.subr.mxu0 0.0
        %509 = vmatpush2.msra.mxu0 0.0
        %510 = vmatprep.subr.mxu0 0.0
        %511 = vmatpush2.msra.mxu0 0.0
        %512 = vmatprep.subr.mxu0 0.0
        %513 = vmatpush2.msra.mxu0 0.0
        %514 = vmatprep.subr.mxu0 0.0
        %515 = vmatpush2.msra.mxu0 0.0
        %516 = vmatprep.subr.mxu0 0.0
        %517 = vmatpush2.msra.mxu0 0.0
        %518 = vmatprep.subr.mxu0 0.0
        %519 = vmatpush2.msra.mxu0 0.0
        %520 = vmatprep.subr.mxu0 0.0
        %521 = vmatpush2.msra.mxu0 0.0
        %522 = vmatprep.mubr.f32.mxu0 0.0
        %523 = vmatmul.mubr.f32.gmra.mxu0 %v456
        %v524 = vpop.f32.mrf.mxu0
        %v525 = vadd.f32 %v452, %v524
        %v526 = vpop.f32.mrf.mxu0
        %v527 = vadd.f32 %v452, %v526
        %528 = vdwg.mxu0
        %529 = vmatprep.subr.mxu0 0.0
        %530 = vmatpush1.msra.mxu0 0.0
        %531 = vmatprep.subr.mxu0 0.0
        %532 = vmatpush1.msra.mxu0 0.0
        %533 = vmatprep.subr.mxu0 0.0
        %534 = vmatpush1.msra.mxu0 0.0
        %535 = vmatprep.subr.mxu0 0.0
        %536 = vmatpush1.msra.mxu0 0.0
        %537 = vmatprep.subr.mxu0 0.0
        %538 = vmatpush1.msra.mxu0 0.0
        %539 = vmatprep.subr.mxu0 0.0
        %540 = vmatpush1.msra.mxu0 0.0
        %541 = vmatprep.subr.mxu0 0.0
        %542 = vmatpush1.msra.mxu0 0.0
        %543 = vmatprep.subr.mxu0 0.0
        %544 = vmatpush1.msra.mxu0 0.0
        %545 = vmatprep.subr.mxu0 0.0
        %546 = vmatpush1.msra.mxu0 0.0
        %547 = vmatprep.subr.mxu0 0.0
        %548 = vmatpush1.msra.mxu0 0.0
        %549 = vmatprep.subr.mxu0 %v446
        %550 = vmatpush1.msra.mxu0 %v444
        %551 = vmatprep.subr.mxu0 %v445
        %552 = vmatpush1.msra.mxu0 %v443
        %553 = vmatprep.subr.mxu0 %v397
        %554 = vmatpush1.msra.mxu0 %v395
        %555 = vmatprep.subr.mxu0 %v396
        %556 = vmatpush1.msra.mxu0 %v394
        %557 = vmatprep.subr.mxu0 %v327
        %558 = vmatpush1.msra.mxu0 %v325
        %559 = vmatprep.subr.mxu0 %v326
        %560 = vmatpush1.msra.mxu0 %v324
        %561 = vmatprep.subr.mxu0 0.0
        %562 = vmatpush2.msra.mxu0 0.0
        %563 = vmatprep.subr.mxu0 0.0
        %564 = vmatpush2.msra.mxu0 0.0
        %565 = vmatprep.subr.mxu0 0.0
        %566 = vmatpush2.msra.mxu0 0.0
        %567 = vmatprep.subr.mxu0 0.0
        %568 = vmatpush2.msra.mxu0 0.0
        %569 = vmatprep.subr.mxu0 0.0
        %570 = vmatpush2.msra.mxu0 0.0
        %571 = vmatprep.subr.mxu0 0.0
        %572 = vmatpush2.msra.mxu0 0.0
        %573 = vmatprep.subr.mxu0 0.0
        %574 = vmatpush2.msra.mxu0 0.0
        %575 = vmatprep.subr.mxu0 0.0
        %576 = vmatpush2.msra.mxu0 0.0
        %577 = vmatprep.subr.mxu0 0.0
        %578 = vmatpush2.msra.mxu0 0.0
        %579 = vmatprep.subr.mxu0 0.0
        %580 = vmatpush2.msra.mxu0 0.0
        %581 = vmatprep.subr.mxu0 0.0
        %582 = vmatpush2.msra.mxu0 0.0
        %583 = vmatprep.subr.mxu0 0.0
        %584 = vmatpush2.msra.mxu0 0.0
        %585 = vmatprep.subr.mxu0 0.0
        %586 = vmatpush2.msra.mxu0 0.0
        %587 = vmatprep.subr.mxu0 0.0
        %588 = vmatpush2.msra.mxu0 0.0
        %589 = vmatprep.subr.mxu0 0.0
        %590 = vmatpush2.msra.mxu0 0.0
        %591 = vmatprep.subr.mxu0 0.0
        %592 = vmatpush2.msra.mxu0 0.0
        %593 = vmatprep.mubr.f32.mxu0 0.0
        %594 = vmatmul.mubr.f32.gmra.mxu0 %v456
        %v595 = vpop.f32.mrf.mxu0
        %v596 = vadd.f32 %v452, %v595
        %v597 = vpop.f32.mrf.mxu0
        %v598 = vadd.f32 %v452, %v597
        %599 = vdwg.mxu0
        %600 = vmatprep.subr.mxu0 0.0
        %601 = vmatpush1.msra.mxu0 0.0
        %602 = vmatprep.subr.mxu0 0.0
        %603 = vmatpush1.msra.mxu0 0.0
        %604 = vmatprep.subr.mxu0 0.0
        %605 = vmatpush1.msra.mxu0 0.0
        %606 = vmatprep.subr.mxu0 0.0
        %607 = vmatpush1.msra.mxu0 0.0
        %608 = vmatprep.subr.mxu0 0.0
        %609 = vmatpush1.msra.mxu0 0.0
        %610 = vmatprep.subr.mxu0 0.0
        %611 = vmatpush1.msra.mxu0 0.0
        %612 = vmatprep.subr.mxu0 0.0
        %613 = vmatpush1.msra.mxu0 0.0
        %614 = vmatprep.subr.mxu0 0.0
        %615 = vmatpush1.msra.mxu0 0.0
        %616 = vmatprep.subr.mxu0 0.0
        %617 = vmatpush1.msra.mxu0 0.0
        %618 = vmatprep.subr.mxu0 0.0
        %619 = vmatpush1.msra.mxu0 0.0
        %620 = vmatprep.subr.mxu0 0.0
        %621 = vmatpush1.msra.mxu0 %v436
        %622 = vmatprep.subr.mxu0 0.0
        %623 = vmatpush1.msra.mxu0 %v435
        %624 = vmatprep.subr.mxu0 0.0
        %625 = vmatpush1.msra.mxu0 %v387
        %626 = vmatprep.subr.mxu0 0.0
        %627 = vmatpush1.msra.mxu0 %v386
        %628 = vmatprep.subr.mxu0 0.0
        %629 = vmatpush1.msra.mxu0 %v317
        %630 = vmatprep.subr.mxu0 0.0
        %631 = vmatpush1.msra.mxu0 %v316
        %632 = vmatprep.subr.mxu0 0.0
        %633 = vmatpush2.msra.mxu0 0.0
        %634 = vmatprep.subr.mxu0 0.0
        %635 = vmatpush2.msra.mxu0 0.0
        %636 = vmatprep.subr.mxu0 0.0
        %637 = vmatpush2.msra.mxu0 0.0
        %638 = vmatprep.subr.mxu0 0.0
        %639 = vmatpush2.msra.mxu0 0.0
        %640 = vmatprep.subr.mxu0 0.0
        %641 = vmatpush2.msra.mxu0 0.0
        %642 = vmatprep.subr.mxu0 0.0
        %643 = vmatpush2.msra.mxu0 0.0
        %644 = vmatprep.subr.mxu0 0.0
        %645 = vmatpush2.msra.mxu0 0.0
        %646 = vmatprep.subr.mxu0 0.0
        %647 = vmatpush2.msra.mxu0 0.0
        %648 = vmatprep.subr.mxu0 0.0
        %649 = vmatpush2.msra.mxu0 0.0
        %650 = vmatprep.subr.mxu0 0.0
        %651 = vmatpush2.msra.mxu0 0.0
        %652 = vmatprep.subr.mxu0 0.0
        %653 = vmatpush2.msra.mxu0 0.0
        %654 = vmatprep.subr.mxu0 0.0
        %655 = vmatpush2.msra.mxu0 0.0
        %656 = vmatprep.subr.mxu0 0.0
        %657 = vmatpush2.msra.mxu0 0.0
        %658 = vmatprep.subr.mxu0 0.0
        %659 = vmatpush2.msra.mxu0 0.0
        %660 = vmatprep.subr.mxu0 0.0
        %661 = vmatpush2.msra.mxu0 0.0
        %662 = vmatprep.subr.mxu0 0.0
        %663 = vmatpush2.msra.mxu0 0.0
        %664 = vmatprep.mubr.f32.mxu0 0.0
        %665 = vmatmul.mubr.f32.gmra.mxu0 %v456
        %v666 = vpop.f32.mrf.mxu0
        %v667 = vadd.f32 %v452, %v666
        %v668 = vpop.f32.mrf.mxu0
        %669 = vdwg.mxu0
        %v670 = vmax.f32 %v525, 0.0
        %v671 = vmax.f32 %v527, 0.0
        %v672 = vmax.f32 %v596, 0.0
        %v673 = vmax.f32 %v598, 0.0
        %v674 = vmax.f32 %v667, 0.0
        %677 = vrot.lane.b32.xlu0 %v671, 126
        %v678 = vpop.permute.xlu0 %677
        %679 = vrot.lane.b32.xlu0 %v672, 126
        %v680 = vpop.permute.xlu0 %679
        %v681 = vsel %vm406, %v678, %v680
        %684 = vrot.lane.b32.xlu0 %v672, 124
        %v685 = vpop.permute.xlu0 %684
        %686 = vrot.lane.b32.xlu0 %v673, 124
        %v687 = vpop.permute.xlu0 %686
        %vm688 = vcmask 1014784
        %v689 = vsel %vm688, %v685, %v687
        %692 = vrot.lane.b32.xlu0 %v673, 122
        %v693 = vpop.permute.xlu0 %692
        %694 = vrot.lane.b32.xlu0 %v674, 122
        %v695 = vpop.permute.xlu0 %694
        %vm696 = vcmask 998400
        %v697 = vsel %vm696, %v693, %v695
        %700 = vrot.lane.b32.xlu0 %v670, 127
        %v701 = vpop.permute.xlu0 %700
        %702 = vrot.lane.b32.xlu0 %v671, 127
        %v703 = vpop.permute.xlu0 %702
        %v704 = vsel %vm340, %v701, %v703
        %706 = vrot.lane.b32.xlu0 %v671, 125
        %v707 = vpop.permute.xlu0 %706
        %708 = vrot.lane.b32.xlu0 %v672, 125
        %v709 = vpop.permute.xlu0 %708
        %vm710 = vcmask 1022976
        %v711 = vsel %vm710, %v707, %v709
        %713 = vrot.lane.b32.xlu0 %v672, 123
        %v714 = vpop.permute.xlu0 %713
        %715 = vrot.lane.b32.xlu0 %v673, 123
        %v716 = vpop.permute.xlu0 %715
        %vm717 = vcmask 1006592
        %v718 = vsel %vm717, %v714, %v716
        %720 = vrot.lane.b32.xlu0 %v673, 121
        %v721 = vpop.permute.xlu0 %720
        %722 = vrot.lane.b32.xlu0 %v674, 121
        %v723 = vpop.permute.xlu0 %722
        %vm724 = vcmask 990208
        %v725 = vsel %vm724, %v721, %v723
        %727 = vrot.lane.b32.xlu0 %v670, 126
        %v728 = vpop.permute.xlu0 %727
        %v729 = vsel %vm406, %v728, %v678
        %731 = vrot.lane.b32.xlu0 %v671, 124
        %v732 = vpop.permute.xlu0 %731
        %v733 = vsel %vm688, %v732, %v685
        %735 = vrot.lane.b32.xlu0 %v672, 122
        %v736 = vpop.permute.xlu0 %735
        %v737 = vsel %vm696, %v736, %v693
        %739 = vrot.lane.b32.xlu0 %v673, 120
        %v740 = vpop.permute.xlu0 %739
        %741 = vrot.lane.b32.xlu0 %v674, 120
        %v742 = vpop.permute.xlu0 %741
        %vm743 = vcmask 982016
        %v744 = vsel %vm743, %v740, %v742
        %v746 = vld [vmem:[%s3] sm:$0xf]
        %v747 = vld [vmem:[%s4] sm:$0xf]
        %749 = vset.pattern.permute.xlu0 0
        %750 = vperm.xlu0 %749, %v747
        %v751 = vpop.permute.xlu0 %750
        %vm753 = vcmask 195584
        %v755 = vsel %vm753, %v746, 0
        %757 = vmatprep.subr.mxu0 0.0
        %758 = vmatpush1.msra.mxu0 0.0
        %759 = vmatprep.subr.mxu0 0.0
        %760 = vmatpush1.msra.mxu0 0.0
        %761 = vmatprep.subr.mxu0 0.0
        %762 = vmatpush1.msra.mxu0 0.0
        %763 = vmatprep.subr.mxu0 0.0
        %764 = vmatpush1.msra.mxu0 0.0
        %765 = vmatprep.subr.mxu0 0.0
        %766 = vmatpush1.msra.mxu0 0.0
        %767 = vmatprep.subr.mxu0 0.0
        %768 = vmatpush1.msra.mxu0 0.0
        %769 = vmatprep.subr.mxu0 0.0
        %770 = vmatpush1.msra.mxu0 0.0
        %771 = vmatprep.subr.mxu0 0.0
        %772 = vmatpush1.msra.mxu0 0.0
        %773 = vmatprep.subr.mxu0 0.0
        %774 = vmatpush1.msra.mxu0 0.0
        %775 = vmatprep.subr.mxu0 0.0
        %776 = vmatpush1.msra.mxu0 0.0
        %777 = vmatprep.subr.mxu0 0.0
        %778 = vmatpush1.msra.mxu0 0.0
        %779 = vmatprep.subr.mxu0 0.0
        %780 = vmatpush1.msra.mxu0 0.0
        %781 = vmatprep.subr.mxu0 0.0
        %782 = vmatpush1.msra.mxu0 0.0
        %783 = vmatprep.subr.mxu0 %v733
        %784 = vmatpush1.msra.mxu0 %v729
        %785 = vmatprep.subr.mxu0 %v711
        %786 = vmatpush1.msra.mxu0 %v704
        %787 = vmatprep.subr.mxu0 %v681
        %788 = vmatpush1.msra.mxu0 %v670
        %789 = vmatprep.subr.mxu0 0.0
        %790 = vmatpush2.msra.mxu0 0.0
        %791 = vmatprep.subr.mxu0 0.0
        %792 = vmatpush2.msra.mxu0 0.0
        %793 = vmatprep.subr.mxu0 0.0
        %794 = vmatpush2.msra.mxu0 0.0
        %795 = vmatprep.subr.mxu0 0.0
        %796 = vmatpush2.msra.mxu0 0.0
        %797 = vmatprep.subr.mxu0 0.0
        %798 = vmatpush2.msra.mxu0 0.0
        %799 = vmatprep.subr.mxu0 0.0
        %800 = vmatpush2.msra.mxu0 0.0
        %801 = vmatprep.subr.mxu0 0.0
        %802 = vmatpush2.msra.mxu0 0.0
        %803 = vmatprep.subr.mxu0 0.0
        %804 = vmatpush2.msra.mxu0 0.0
        %805 = vmatprep.subr.mxu0 0.0
        %806 = vmatpush2.msra.mxu0 0.0
        %807 = vmatprep.subr.mxu0 0.0
        %808 = vmatpush2.msra.mxu0 0.0
        %809 = vmatprep.subr.mxu0 0.0
        %810 = vmatpush2.msra.mxu0 0.0
        %811 = vmatprep.subr.mxu0 0.0
        %812 = vmatpush2.msra.mxu0 0.0
        %813 = vmatprep.subr.mxu0 0.0
        %814 = vmatpush2.msra.mxu0 0.0
        %815 = vmatprep.subr.mxu0 0.0
        %816 = vmatpush2.msra.mxu0 0.0
        %817 = vmatprep.subr.mxu0 0.0
        %818 = vmatpush2.msra.mxu0 0.0
        %819 = vmatprep.subr.mxu0 0.0
        %820 = vmatpush2.msra.mxu0 0.0
        %821 = vmatprep.mubr.f32.mxu0 0.0
        %822 = vmatmul.mubr.f32.gmra.mxu0 %v755
        %v823 = vpop.f32.mrf.mxu0
        %v824 = vadd.f32 %v751, %v823
        %v825 = vpop.f32.mrf.mxu0
        %v826 = vadd.f32 %v751, %v825
        %827 = vdwg.mxu0
        %828 = vmatprep.subr.mxu0 0.0
        %829 = vmatpush1.msra.mxu0 0.0
        %830 = vmatprep.subr.mxu0 0.0
        %831 = vmatpush1.msra.mxu0 0.0
        %832 = vmatprep.subr.mxu0 0.0
        %833 = vmatpush1.msra.mxu0 0.0
        %834 = vmatprep.subr.mxu0 0.0
        %835 = vmatpush1.msra.mxu0 0.0
        %836 = vmatprep.subr.mxu0 0.0
        %837 = vmatpush1.msra.mxu0 0.0
        %838 = vmatprep.subr.mxu0 0.0
        %839 = vmatpush1.msra.mxu0 0.0
        %840 = vmatprep.subr.mxu0 0.0
        %841 = vmatpush1.msra.mxu0 0.0
        %842 = vmatprep.subr.mxu0 0.0
        %843 = vmatpush1.msra.mxu0 0.0
        %844 = vmatprep.subr.mxu0 0.0
        %845 = vmatpush1.msra.mxu0 0.0
        %846 = vmatprep.subr.mxu0 0.0
        %847 = vmatpush1.msra.mxu0 0.0
        %848 = vmatprep.subr.mxu0 0.0
        %849 = vmatpush1.msra.mxu0 0.0
        %850 = vmatprep.subr.mxu0 0.0
        %851 = vmatpush1.msra.mxu0 0.0
        %852 = vmatprep.subr.mxu0 0.0
        %853 = vmatpush1.msra.mxu0 0.0
        %854 = vmatprep.subr.mxu0 %v744
        %855 = vmatpush1.msra.mxu0 %v737
        %856 = vmatprep.subr.mxu0 %v725
        %857 = vmatpush1.msra.mxu0 %v718
        %858 = vmatprep.subr.mxu0 %v697
        %859 = vmatpush1.msra.mxu0 %v689
        %860 = vmatprep.subr.mxu0 0.0
        %861 = vmatpush2.msra.mxu0 0.0
        %862 = vmatprep.subr.mxu0 0.0
        %863 = vmatpush2.msra.mxu0 0.0
        %864 = vmatprep.subr.mxu0 0.0
        %865 = vmatpush2.msra.mxu0 0.0
        %866 = vmatprep.subr.mxu0 0.0
        %867 = vmatpush2.msra.mxu0 0.0
        %868 = vmatprep.subr.mxu0 0.0
        %869 = vmatpush2.msra.mxu0 0.0
        %870 = vmatprep.subr.mxu0 0.0
        %871 = vmatpush2.msra.mxu0 0.0
        %872 = vmatprep.subr.mxu0 0.0
        %873 = vmatpush2.msra.mxu0 0.0
        %874 = vmatprep.subr.mxu0 0.0
        %875 = vmatpush2.msra.mxu0 0.0
        %876 = vmatprep.subr.mxu0 0.0
        %877 = vmatpush2.msra.mxu0 0.0
        %878 = vmatprep.subr.mxu0 0.0
        %879 = vmatpush2.msra.mxu0 0.0
        %880 = vmatprep.subr.mxu0 0.0
        %881 = vmatpush2.msra.mxu0 0.0
        %882 = vmatprep.subr.mxu0 0.0
        %883 = vmatpush2.msra.mxu0 0.0
        %884 = vmatprep.subr.mxu0 0.0
        %885 = vmatpush2.msra.mxu0 0.0
        %886 = vmatprep.subr.mxu0 0.0
        %887 = vmatpush2.msra.mxu0 0.0
        %888 = vmatprep.subr.mxu0 0.0
        %889 = vmatpush2.msra.mxu0 0.0
        %890 = vmatprep.subr.mxu0 0.0
        %891 = vmatpush2.msra.mxu0 0.0
        %892 = vmatprep.mubr.f32.mxu0 0.0
        %893 = vmatmul.mubr.f32.gmra.mxu0 %v755
        %v894 = vpop.f32.mrf.mxu0
        %v895 = vadd.f32 %v751, %v894
        %v896 = vpop.f32.mrf.mxu0
        %v897 = vadd.f32 %v751, %v896
        %898 = vdwg.mxu0
        %v899 = vmax.f32 %v824, 0.0
        %v900 = vmax.f32 %v826, 0.0
        %v901 = vmax.f32 %v895, 0.0
        %v902 = vmax.f32 %v897, 0.0
        %903 = vst [vmem:[%s243] sm:$0xf] %v899
        %s904 = scalar_lea.vmem %s243, 4 [#allocation5]
        %905 = vst [vmem:[%s904] sm:$0xf] %v900
        %s906 = scalar_lea.vmem %s243, 8 [#allocation5]
        %907 = vst [vmem:[%s906] sm:$0xf] %v901
        %s908 = scalar_lea.vmem %s243, 12 [#allocation5]
        %909 = vst [vmem:[%s908] sm:$0xf] %v902
        %s910 = sand.u32 %s140, 1
        %s911 = scalar_lea.sflag [#allocation4], %s910
        %s912 = sand.u32 %s140, 1
        %s913 = smul.addr %s912, 16
        %s914 = scalar_lea.vmem [#allocation5], %s913
        // Predicated region
        $region45: #{tpu_custom_call.1} parent=39 // pred_check
          %p915 = pneg %p150
        $region46: #{tpu_custom_call.1} parent=39 // pred_check_branch
          %917 = sbr.rel (%p915) target = $region48
        $region47: #{tpu_custom_call.1} parent=39 // pred_region
          %s918 = smul.u32 4, %s22
          %s920 = ssub.s32 256, 256
          %921 = vsyncadd %s911, %s920
          %s922 = smul.addr %s918, 64
          %s923 = scalar_lea.hbm %s5, %s922
          %s924 = sshll.u32 %s914, 4
          %s925 = int_to_ptr.vmem [resolvable:$true] %s924
          %930 = dma.vmem_to_hbm [thread:$0]  %s925, 256, %s923, %s911, 64, 64, 4
        $region48: #{tpu_custom_call.1} parent=39 // pred_fallthru
          _
      $region40: #{tpu_custom_call.1} parent=5 // pred_fallthru
        _
      %p931 = scmp.le.s32.totalorder 2, %s17
      // Predicated region
      $region49: #{tpu_custom_call.1} parent=5 // pred_check
        %p932 = pneg %p931
      $region50: #{tpu_custom_call.1} parent=5 // pred_check_branch
        %934 = sbr.rel (%p932) target = $region52
      $region51: #{tpu_custom_call.1} parent=5 // pred_region
        %s935 = ssub.s32 %s17, 2
        // Predicated region
        $region53: #{tpu_custom_call.1} parent=51 // pred_check
          %p936 = pneg %p156
        $region54: #{tpu_custom_call.1} parent=51 // pred_check_branch
          %938 = sbr.rel (%p936) target = $region56
        $region55: #{tpu_custom_call.1} parent=51 // pred_region
          %s939 = sand.u32 %s141, 1
          %s940 = scalar_lea.sflag [#allocation4], %s939
          %s941 = sand.u32 %s141, 1
          %s942 = smul.addr %s941, 16
          %s943 = scalar_lea.vmem [#allocation5], %s942
          %944 = dma.done %s940, 256
        $region56: #{tpu_custom_call.1} parent=51 // pred_fallthru
          _
      $region52: #{tpu_custom_call.1} parent=5 // pred_fallthru
        _
    $region6: #{tpu_custom_call.1} parent=1 // loop_footer
      %s21 = sadd.s32 1, %s17
    $region7: #{tpu_custom_call.1} parent=1 // loop_footer_branch
      %16 = sbr.rel target = $region3
    $region8: #{tpu_custom_call.1} parent=1 // loop_exit
      _
    %945 = vsyncpa [#allocation3], 1
    %s946 = scalar_lea.sflag [#allocation3], 1
    %947 = vsyncpa %s946, 1
    %948 = vsyncpa [#allocation4], 1
    %s949 = scalar_lea.sflag [#allocation4], 1
    %950 = vsyncpa %s949, 1

</llo_original>
